<compile_context>
chip_gen: v7x
topology: tpu7x:2x2x1
jax: 0.10.0
libtpu: 0.0.40
codegen_flags: <defaults>
</compile_context>

<pallas_src>
import functools

import jax
import jax.numpy as jnp
from jax import lax
from jax.experimental import pallas as pl
from jax.experimental.pallas import tpu as pltpu


def _mha_kernel(x_ref, wqkv_ref, bqkv_ref, wp_ref, bp_ref, o_ref,
                qkv_ref, ctx_ref, *,
                emb_size: int, num_heads: int, n_actual: int, compute_dtype):
    """One batch element per grid step. All blocks are full (N, E)-style tiles."""
    head_dim = emb_size // num_heads
    scale = 1.0 / (emb_size ** 0.5)
    cd = jnp.dtype(compute_dtype)
    # Approx EUP reciprocal only when we are already in the bf16 noise floor.
    approx = cd != jnp.dtype(jnp.float32)
    n_pad = x_ref.shape[1]

    x = x_ref[0].astype(cd)                                        # (Np, E)

    # Fused QKV projection: one full-width MXU matmul, bias add in f32, a
    # single f32->compute_dtype cast into a lane-dense VMEM scratch slab.
    qkv_ref[...] = (jnp.dot(x, wqkv_ref[...],
                            preferred_element_type=jnp.float32)
                    + bqkv_ref[...]).astype(cd)                    # (Np, 3E)

    # Key-padding mask (only emitted when the wrapper actually padded N).
    padded = n_pad != n_actual
    if padded:
        col = lax.broadcasted_iota(jnp.int32, (n_pad, n_pad), 1)
        key_mask = col < n_actual

    # Per-head attention (static unroll; see header comment).
    for h in range(num_heads):
        q_sl = slice(h * head_dim, (h + 1) * head_dim)
        k_sl = slice(emb_size + h * head_dim, emb_size + (h + 1) * head_dim)
        v_sl = slice(2 * emb_size + h * head_dim, 2 * emb_size + (h + 1) * head_dim)

        qh = qkv_ref[:, q_sl]                                      # (Np, d) cd
        kh = qkv_ref[:, k_sl]                                      # (Np, d) cd
        vh = qkv_ref[:, v_sl]                                      # (Np, d) cd

        # q @ k^T contracting the last axis of both — no explicit transpose.
        energy = lax.dot_general(
            qh, kh, (((1,), (1,)), ((), ())),
            preferred_element_type=jnp.float32)                    # (Np, Np) f32
        if padded:
            energy = jnp.where(key_mask, energy, -jnp.inf)

        # Online-style softmax with DEFERRED normalization: exponentials feed
        # the att@V matmul directly; normalization (and the module's post-
        # softmax 1/sqrt(E) scale) is applied to the (Np, d) result.
        m = jnp.max(energy, axis=-1, keepdims=True)                # (Np, 1) f32
        e = jnp.exp((energy - m).astype(cd))                       # (Np, Np) cd
        s = jnp.sum(e, axis=-1, keepdims=True, dtype=jnp.float32)  # (Np, 1) f32

        ctx = jnp.dot(e, vh, preferred_element_type=jnp.float32)   # (Np, d) f32
        inv = pl.reciprocal(s, approx=approx) * scale              # (Np, 1) f32
        ctx_ref[:, q_sl] = (ctx * inv).astype(cd)                  # lane-dense write

    # Fused output projection off the lane-dense ctx slab (full MXU fill).
    out = jnp.dot(ctx_ref[...], wp_ref[...],
                  preferred_element_type=jnp.float32) + bp_ref[...]
    o_ref[0] = out.astype(o_ref.dtype)


def multi_head_attention(x, params, *, emb_size: int, num_heads: int,
                         compute_dtype=jnp.bfloat16):
    """x: (B, N, E) float32. params: dict of f32 weights/biases in (in, out) layout.

    compute_dtype: dtype of the MXU operands and of exp (bf16 recommended on
    v6e/v7x; use jnp.float32 on v5e or for an exact path). Accumulation and
    softmax statistics are always f32.
    """
    B, N, E = x.shape
    assert E == emb_size and emb_size % num_heads == 0
    cd = jnp.dtype(compute_dtype)

    # Pad N up to a multiple of 8 for clean sublane tiling (e.g. ViT N=197).
    n_pad = ((N + 7) // 8) * 8
    x_p = x if n_pad == N else jnp.pad(x, ((0, 0), (0, n_pad - N), (0, 0)))

    # Host-side fusion of the Q/K/V projection weights -> one (E, 3E) slab.
    wqkv = jnp.concatenate(
        [params["wq"], params["wk"], params["wv"]], axis=1).astype(cd)   # (E, 3E)
    bqkv = jnp.concatenate(
        [params["bq"], params["bk"], params["bv"]], axis=1).astype(jnp.float32)
    wp = params["wp"].astype(cd)
    bp = params["bp"].astype(jnp.float32)

    kernel = functools.partial(_mha_kernel, emb_size=emb_size,
                               num_heads=num_heads, n_actual=N, compute_dtype=cd)

    out = pl.pallas_call(
        kernel,
        out_shape=jax.ShapeDtypeStruct((B, n_pad, E), x.dtype),
        grid_spec=pltpu.PrefetchScalarGridSpec(
            num_scalar_prefetch=0,
            grid=(B,),
            in_specs=[
                pl.BlockSpec((1, n_pad, E), lambda b: (b, 0, 0)),   # x
                pl.BlockSpec((E, 3 * E), lambda b: (0, 0)),         # fused Wqkv
                pl.BlockSpec((1, 3 * E), lambda b: (0, 0)),         # fused bqkv
                pl.BlockSpec((E, E), lambda b: (0, 0)),             # Wproj
                pl.BlockSpec((1, E), lambda b: (0, 0)),             # bproj
            ],
            out_specs=pl.BlockSpec((1, n_pad, E), lambda b: (b, 0, 0)),
            scratch_shapes=[
                pltpu.VMEM((n_pad, 3 * E), cd),                     # fused QKV slab
                pltpu.VMEM((n_pad, E), cd),                         # merged-head ctx
            ],
        ),
        compiler_params=pltpu.CompilerParams(
            dimension_semantics=("parallel",)),
    )(x_p, wqkv, bqkv, wp, bp)

    return out if n_pad == N else out[:, :N, :]


def _reference(x, params, *, emb_size, num_heads):
    """Pure-JAX f32 reference mirroring the torch module (eval mode)."""
    B, N, E = x.shape
    d = emb_size // num_heads

    def lin(x, w, b):
        return x @ w + b

    q = lin(x, params["wq"], params["bq"]).reshape(B, N, num_heads, d).transpose(0, 2, 1, 3)
    k = lin(x, params["wk"], params["bk"]).reshape(B, N, num_heads, d).transpose(0, 2, 1, 3)
    v = lin(x, params["wv"], params["bv"]).reshape(B, N, num_heads, d).transpose(0, 2, 1, 3)

    energy = jnp.einsum("bhqd,bhkd->bhqk", q, k)
    att = jax.nn.softmax(energy, axis=-1) / (emb_size ** 0.5)
    out = jnp.einsum("bhal,bhlv->bhav", att, v)
    out = out.transpose(0, 2, 1, 3).reshape(B, N, E)
    return lin(out, params["wp"], params["bp"])


if __name__ == "__main__":
    # Small shapes consistent with the module: emb divisible by num_heads.
    B, N, E, H = 2, 8, 32, 4

    key = jax.random.PRNGKey(0)
    keys = jax.random.split(key, 9)
    s = 1.0 / (E ** 0.5)
    params = {
        "wq": jax.random.uniform(keys[0], (E, E), jnp.float32, -s, s),
        "bq": jax.random.uniform(keys[1], (1, E), jnp.float32, -s, s),
        "wk": jax.random.uniform(keys[2], (E, E), jnp.float32, -s, s),
        "bk": jax.random.uniform(keys[3], (1, E), jnp.float32, -s, s),
        "wv": jax.random.uniform(keys[4], (E, E), jnp.float32, -s, s),
        "bv": jax.random.uniform(keys[5], (1, E), jnp.float32, -s, s),
        "wp": jax.random.uniform(keys[6], (E, E), jnp.float32, -s, s),
        "bp": jax.random.uniform(keys[7], (1, E), jnp.float32, -s, s),
    }
    x = jax.random.normal(keys[8], (B, N, E), jnp.float32)

    ref = _reference(x, params, emb_size=E, num_heads=H)

    # Exact f32 compute path — tight correctness gate.
    out_f32 = multi_head_attention(x, params, emb_size=E, num_heads=H,
                                   compute_dtype=jnp.float32)
    out_f32 = jax.block_until_ready(out_f32)
    assert out_f32.shape == (B, N, E)
    assert jnp.allclose(out_f32, ref, atol=1e-4, rtol=1e-4), "f32 mismatch vs reference"

    # Default bf16 MXU / bf16-exp path (faster on v6e/v7x) — looser tolerance.
    out_bf16 = multi_head_attention(x, params, emb_size=E, num_heads=H)
    out_bf16 = jax.block_until_ready(out_bf16)
    assert out_bf16.shape == (B, N, E)
    assert jnp.allclose(out_bf16, ref, atol=5e-2, rtol=5e-2), "bf16 mismatch vs reference"

    # Non-multiple-of-8 token count — exercises the wrapper padding + in-kernel
    # key masking path (f32 for a tight gate).
    N2 = 7
    x2 = jax.random.normal(jax.random.PRNGKey(1), (B, N2, E), jnp.float32)
    ref2 = _reference(x2, params, emb_size=E, num_heads=H)
    out2 = multi_head_attention(x2, params, emb_size=E, num_heads=H,
                                compute_dtype=jnp.float32)
    out2 = jax.block_until_ready(out2)
    assert out2.shape == (B, N2, E)
    assert jnp.allclose(out2, ref2, atol=1e-4, rtol=1e-4), "padded-N mismatch vs reference"

    print("KERNEL_OK")
</pallas_src>

<mosaic_0001>
module attributes {stable_mosaic.version = 11 : i64} {
  func.func @_mha_kernel(%arg0: i32, %arg1: memref<1x8x32xf32, #tpu.memory_space<vmem>>, %arg2: memref<32x96xf32, #tpu.memory_space<vmem>>, %arg3: memref<1x96xf32, #tpu.memory_space<vmem>>, %arg4: memref<32x32xf32, #tpu.memory_space<vmem>>, %arg5: memref<1x32xf32, #tpu.memory_space<vmem>>, %arg6: memref<1x8x32xf32, #tpu.memory_space<vmem>>, %arg7: memref<8x96xf32, #tpu.memory_space<vmem>>, %arg8: memref<8x32xf32, #tpu.memory_space<vmem>>) attributes {dimension_semantics = [#tpu.dimension_semantics<parallel>], iteration_bounds = array<i64: 2>, scalar_prefetch = 0 : i64, scratch_operands = 2 : i64, tpu.core_type = #tpu.core_type<tc>, window_params = [{transform_indices = @transform_0, window_bounds = array<i64: 1, 8, 32>}, {pipeline_mode = #tpu.pipeline_mode<synchronous>, transform_indices = @transform_1, window_bounds = array<i64: 32, 96>}, {pipeline_mode = #tpu.pipeline_mode<synchronous>, transform_indices = @transform_2, window_bounds = array<i64: 1, 96>}, {pipeline_mode = #tpu.pipeline_mode<synchronous>, transform_indices = @transform_3, window_bounds = array<i64: 32, 32>}, {pipeline_mode = #tpu.pipeline_mode<synchronous>, transform_indices = @transform_4, window_bounds = array<i64: 1, 32>}, {transform_indices = @transform_5, window_bounds = array<i64: 1, 8, 32>}]} {
    %c0 = arith.constant 0 : index
    %c0_0 = arith.constant 0 : index
    %c0_1 = arith.constant 0 : index
    %0 = vector.load %arg1[%c0, %c0_0, %c0_1] : memref<1x8x32xf32, #tpu.memory_space<vmem>>, vector<1x8x32xf32>
    %1 = vector.shape_cast %0 : vector<1x8x32xf32> to vector<8x32xf32>
    %c0_2 = arith.constant 0 : index
    %c0_3 = arith.constant 0 : index
    %2 = vector.load %arg2[%c0_2, %c0_3] : memref<32x96xf32, #tpu.memory_space<vmem>>, vector<32x96xf32>
    %cst = arith.constant dense<0.000000e+00> : vector<8x96xf32>
    %3 = tpu.matmul %1, %2, %cst {dimension_numbers = #tpu.dot_dimension_numbers<[1], [0], [0], [1], [0, 0, 1, 1], [], []>} : vector<8x32xf32>, vector<32x96xf32>, vector<8x96xf32> -> vector<8x96xf32>
    %c0_4 = arith.constant 0 : index
    %c0_5 = arith.constant 0 : index
    %4 = vector.load %arg3[%c0_4, %c0_5] : memref<1x96xf32, #tpu.memory_space<vmem>>, vector<1x96xf32>
    %5 = vector.broadcast %4 : vector<1x96xf32> to vector<8x96xf32>
    %6 = arith.addf %3, %5 : vector<8x96xf32>
    %c0_6 = arith.constant 0 : index
    %c0_7 = arith.constant 0 : index
    %7 = vector.load %arg7[%c0_6, %c0_7] : memref<8x96xf32, #tpu.memory_space<vmem>>, vector<8x96xf32>
    tpu.vector_store %arg7[%c0_6, %c0_7], %6 {strides = array<i32>} : memref<8x96xf32, #tpu.memory_space<vmem>>, vector<8x96xf32>,
    %c0_8 = arith.constant 0 : index
    %c0_9 = arith.constant 0 : index
    %8 = vector.load %arg7[%c0_8, %c0_9] : memref<8x96xf32, #tpu.memory_space<vmem>>, vector<8x8xf32>
    %c0_10 = arith.constant 0 : index
    %c32 = arith.constant 32 : index
    %9 = vector.load %arg7[%c0_10, %c32] : memref<8x96xf32, #tpu.memory_space<vmem>>, vector<8x8xf32>
    %c0_11 = arith.constant 0 : index
    %c64 = arith.constant 64 : index
    %10 = vector.load %arg7[%c0_11, %c64] : memref<8x96xf32, #tpu.memory_space<vmem>>, vector<8x8xf32>
    %cst_12 = arith.constant dense<0.000000e+00> : vector<8x8xf32>
    %11 = tpu.matmul %8, %9, %cst_12 {dimension_numbers = #tpu.dot_dimension_numbers<[1], [1], [0], [0], [0, 0, 1, 0], [], []>} : vector<8x8xf32>, vector<8x8xf32>, vector<8x8xf32> -> vector<8x8xf32>
    %cst_13 = arith.constant dense<0xFF800000> : vector<8xf32>
    %12 = vector.multi_reduction <maximumf>, %11, %cst_13 [1] : vector<8x8xf32> to vector<8xf32>
    %13 = vector.shape_cast %12 : vector<8xf32> to vector<8x1xf32>
    %14 = vector.broadcast %13 : vector<8x1xf32> to vector<8x8xf32>
    %15 = arith.subf %11, %14 : vector<8x8xf32>
    %16 = math.exp %15 : vector<8x8xf32>
    %cst_14 = arith.constant dense<0.000000e+00> : vector<8xf32>
    %17 = vector.multi_reduction <add>, %16, %cst_14 [1] : vector<8x8xf32> to vector<8xf32>
    %18 = vector.shape_cast %17 : vector<8xf32> to vector<8x1xf32>
    %cst_15 = arith.constant dense<0.000000e+00> : vector<8x8xf32>
    %19 = tpu.matmul %16, %10, %cst_15 {dimension_numbers = #tpu.dot_dimension_numbers<[1], [0], [0], [1], [0, 0, 1, 1], [], []>} : vector<8x8xf32>, vector<8x8xf32>, vector<8x8xf32> -> vector<8x8xf32>
    %20 = tpu.reciprocal %18 : vector<8x1xf32> -> vector<8x1xf32>
    %cst_16 = arith.constant 0.176776692 : f32
    %21 = vector.broadcast %cst_16 : f32 to vector<8x1xf32>
    %22 = arith.mulf %20, %21 : vector<8x1xf32>
    %23 = vector.broadcast %22 : vector<8x1xf32> to vector<8x8xf32>
    %24 = arith.mulf %19, %23 : vector<8x8xf32>
    %c0_17 = arith.constant 0 : index
    %c0_18 = arith.constant 0 : index
    %25 = vector.load %arg8[%c0_17, %c0_18] : memref<8x32xf32, #tpu.memory_space<vmem>>, vector<8x8xf32>
    tpu.vector_store %arg8[%c0_17, %c0_18], %24 {strides = array<i32>} : memref<8x32xf32, #tpu.memory_space<vmem>>, vector<8x8xf32>,
    %c0_19 = arith.constant 0 : index
    %c8 = arith.constant 8 : index
    %26 = vector.load %arg7[%c0_19, %c8] : memref<8x96xf32, #tpu.memory_space<vmem>>, vector<8x8xf32>
    %c0_20 = arith.constant 0 : index
    %c40 = arith.constant 40 : index
    %27 = vector.load %arg7[%c0_20, %c40] : memref<8x96xf32, #tpu.memory_space<vmem>>, vector<8x8xf32>
    %c0_21 = arith.constant 0 : index
    %c72 = arith.constant 72 : index
    %28 = vector.load %arg7[%c0_21, %c72] : memref<8x96xf32, #tpu.memory_space<vmem>>, vector<8x8xf32>
    %cst_22 = arith.constant dense<0.000000e+00> : vector<8x8xf32>
    %29 = tpu.matmul %26, %27, %cst_22 {dimension_numbers = #tpu.dot_dimension_numbers<[1], [1], [0], [0], [0, 0, 1, 0], [], []>} : vector<8x8xf32>, vector<8x8xf32>, vector<8x8xf32> -> vector<8x8xf32>
    %cst_23 = arith.constant dense<0xFF800000> : vector<8xf32>
    %30 = vector.multi_reduction <maximumf>, %29, %cst_23 [1] : vector<8x8xf32> to vector<8xf32>
    %31 = vector.shape_cast %30 : vector<8xf32> to vector<8x1xf32>
    %32 = vector.broadcast %31 : vector<8x1xf32> to vector<8x8xf32>
    %33 = arith.subf %29, %32 : vector<8x8xf32>
    %34 = math.exp %33 : vector<8x8xf32>
    %cst_24 = arith.constant dense<0.000000e+00> : vector<8xf32>
    %35 = vector.multi_reduction <add>, %34, %cst_24 [1] : vector<8x8xf32> to vector<8xf32>
    %36 = vector.shape_cast %35 : vector<8xf32> to vector<8x1xf32>
    %cst_25 = arith.constant dense<0.000000e+00> : vector<8x8xf32>
    %37 = tpu.matmul %34, %28, %cst_25 {dimension_numbers = #tpu.dot_dimension_numbers<[1], [0], [0], [1], [0, 0, 1, 1], [], []>} : vector<8x8xf32>, vector<8x8xf32>, vector<8x8xf32> -> vector<8x8xf32>
    %38 = tpu.reciprocal %36 : vector<8x1xf32> -> vector<8x1xf32>
    %cst_26 = arith.constant 0.176776692 : f32
    %39 = vector.broadcast %cst_26 : f32 to vector<8x1xf32>
    %40 = arith.mulf %38, %39 : vector<8x1xf32>
    %41 = vector.broadcast %40 : vector<8x1xf32> to vector<8x8xf32>
    %42 = arith.mulf %37, %41 : vector<8x8xf32>
    %c0_27 = arith.constant 0 : index
    %c8_28 = arith.constant 8 : index
    %43 = vector.load %arg8[%c0_27, %c8_28] : memref<8x32xf32, #tpu.memory_space<vmem>>, vector<8x8xf32>
    tpu.vector_store %arg8[%c0_27, %c8_28], %42 {strides = array<i32>} : memref<8x32xf32, #tpu.memory_space<vmem>>, vector<8x8xf32>,
    %c0_29 = arith.constant 0 : index
    %c16 = arith.constant 16 : index
    %44 = vector.load %arg7[%c0_29, %c16] : memref<8x96xf32, #tpu.memory_space<vmem>>, vector<8x8xf32>
    %c0_30 = arith.constant 0 : index
    %c48 = arith.constant 48 : index
    %45 = vector.load %arg7[%c0_30, %c48] : memref<8x96xf32, #tpu.memory_space<vmem>>, vector<8x8xf32>
    %c0_31 = arith.constant 0 : index
    %c80 = arith.constant 80 : index
    %46 = vector.load %arg7[%c0_31, %c80] : memref<8x96xf32, #tpu.memory_space<vmem>>, vector<8x8xf32>
    %cst_32 = arith.constant dense<0.000000e+00> : vector<8x8xf32>
    %47 = tpu.matmul %44, %45, %cst_32 {dimension_numbers = #tpu.dot_dimension_numbers<[1], [1], [0], [0], [0, 0, 1, 0], [], []>} : vector<8x8xf32>, vector<8x8xf32>, vector<8x8xf32> -> vector<8x8xf32>
    %cst_33 = arith.constant dense<0xFF800000> : vector<8xf32>
    %48 = vector.multi_reduction <maximumf>, %47, %cst_33 [1] : vector<8x8xf32> to vector<8xf32>
    %49 = vector.shape_cast %48 : vector<8xf32> to vector<8x1xf32>
    %50 = vector.broadcast %49 : vector<8x1xf32> to vector<8x8xf32>
    %51 = arith.subf %47, %50 : vector<8x8xf32>
    %52 = math.exp %51 : vector<8x8xf32>
    %cst_34 = arith.constant dense<0.000000e+00> : vector<8xf32>
    %53 = vector.multi_reduction <add>, %52, %cst_34 [1] : vector<8x8xf32> to vector<8xf32>
    %54 = vector.shape_cast %53 : vector<8xf32> to vector<8x1xf32>
    %cst_35 = arith.constant dense<0.000000e+00> : vector<8x8xf32>
    %55 = tpu.matmul %52, %46, %cst_35 {dimension_numbers = #tpu.dot_dimension_numbers<[1], [0], [0], [1], [0, 0, 1, 1], [], []>} : vector<8x8xf32>, vector<8x8xf32>, vector<8x8xf32> -> vector<8x8xf32>
    %56 = tpu.reciprocal %54 : vector<8x1xf32> -> vector<8x1xf32>
    %cst_36 = arith.constant 0.176776692 : f32
    %57 = vector.broadcast %cst_36 : f32 to vector<8x1xf32>
    %58 = arith.mulf %56, %57 : vector<8x1xf32>
    %59 = vector.broadcast %58 : vector<8x1xf32> to vector<8x8xf32>
    %60 = arith.mulf %55, %59 : vector<8x8xf32>
    %c0_37 = arith.constant 0 : index
    %c16_38 = arith.constant 16 : index
    %61 = vector.load %arg8[%c0_37, %c16_38] : memref<8x32xf32, #tpu.memory_space<vmem>>, vector<8x8xf32>
    tpu.vector_store %arg8[%c0_37, %c16_38], %60 {strides = array<i32>} : memref<8x32xf32, #tpu.memory_space<vmem>>, vector<8x8xf32>,
    %c0_39 = arith.constant 0 : index
    %c24 = arith.constant 24 : index
    %62 = vector.load %arg7[%c0_39, %c24] : memref<8x96xf32, #tpu.memory_space<vmem>>, vector<8x8xf32>
    %c0_40 = arith.constant 0 : index
    %c56 = arith.constant 56 : index
    %63 = vector.load %arg7[%c0_40, %c56] : memref<8x96xf32, #tpu.memory_space<vmem>>, vector<8x8xf32>
    %c0_41 = arith.constant 0 : index
    %c88 = arith.constant 88 : index
    %64 = vector.load %arg7[%c0_41, %c88] : memref<8x96xf32, #tpu.memory_space<vmem>>, vector<8x8xf32>
    %cst_42 = arith.constant dense<0.000000e+00> : vector<8x8xf32>
    %65 = tpu.matmul %62, %63, %cst_42 {dimension_numbers = #tpu.dot_dimension_numbers<[1], [1], [0], [0], [0, 0, 1, 0], [], []>} : vector<8x8xf32>, vector<8x8xf32>, vector<8x8xf32> -> vector<8x8xf32>
    %cst_43 = arith.constant dense<0xFF800000> : vector<8xf32>
    %66 = vector.multi_reduction <maximumf>, %65, %cst_43 [1] : vector<8x8xf32> to vector<8xf32>
    %67 = vector.shape_cast %66 : vector<8xf32> to vector<8x1xf32>
    %68 = vector.broadcast %67 : vector<8x1xf32> to vector<8x8xf32>
    %69 = arith.subf %65, %68 : vector<8x8xf32>
    %70 = math.exp %69 : vector<8x8xf32>
    %cst_44 = arith.constant dense<0.000000e+00> : vector<8xf32>
    %71 = vector.multi_reduction <add>, %70, %cst_44 [1] : vector<8x8xf32> to vector<8xf32>
    %72 = vector.shape_cast %71 : vector<8xf32> to vector<8x1xf32>
    %cst_45 = arith.constant dense<0.000000e+00> : vector<8x8xf32>
    %73 = tpu.matmul %70, %64, %cst_45 {dimension_numbers = #tpu.dot_dimension_numbers<[1], [0], [0], [1], [0, 0, 1, 1], [], []>} : vector<8x8xf32>, vector<8x8xf32>, vector<8x8xf32> -> vector<8x8xf32>
    %74 = tpu.reciprocal %72 : vector<8x1xf32> -> vector<8x1xf32>
    %cst_46 = arith.constant 0.176776692 : f32
    %75 = vector.broadcast %cst_46 : f32 to vector<8x1xf32>
    %76 = arith.mulf %74, %75 : vector<8x1xf32>
    %77 = vector.broadcast %76 : vector<8x1xf32> to vector<8x8xf32>
    %78 = arith.mulf %73, %77 : vector<8x8xf32>
    %c0_47 = arith.constant 0 : index
    %c24_48 = arith.constant 24 : index
    %79 = vector.load %arg8[%c0_47, %c24_48] : memref<8x32xf32, #tpu.memory_space<vmem>>, vector<8x8xf32>
    tpu.vector_store %arg8[%c0_47, %c24_48], %78 {strides = array<i32>} : memref<8x32xf32, #tpu.memory_space<vmem>>, vector<8x8xf32>,
    %c0_49 = arith.constant 0 : index
    %c0_50 = arith.constant 0 : index
    %80 = vector.load %arg8[%c0_49, %c0_50] : memref<8x32xf32, #tpu.memory_space<vmem>>, vector<8x32xf32>
    %c0_51 = arith.constant 0 : index
    %c0_52 = arith.constant 0 : index
    %81 = vector.load %arg4[%c0_51, %c0_52] : memref<32x32xf32, #tpu.memory_space<vmem>>, vector<32x32xf32>
    %cst_53 = arith.constant dense<0.000000e+00> : vector<8x32xf32>
    %82 = tpu.matmul %80, %81, %cst_53 {dimension_numbers = #tpu.dot_dimension_numbers<[1], [0], [0], [1], [0, 0, 1, 1], [], []>} : vector<8x32xf32>, vector<32x32xf32>, vector<8x32xf32> -> vector<8x32xf32>
    %c0_54 = arith.constant 0 : index
    %c0_55 = arith.constant 0 : index
    %83 = vector.load %arg5[%c0_54, %c0_55] : memref<1x32xf32, #tpu.memory_space<vmem>>, vector<1x32xf32>
    %84 = vector.broadcast %83 : vector<1x32xf32> to vector<8x32xf32>
    %85 = arith.addf %82, %84 : vector<8x32xf32>
    %c0_56 = arith.constant 0 : index
    %c0_57 = arith.constant 0 : index
    %c0_58 = arith.constant 0 : index
    %86 = vector.load %arg6[%c0_56, %c0_57, %c0_58] : memref<1x8x32xf32, #tpu.memory_space<vmem>>, vector<1x8x32xf32>
    %87 = vector.shape_cast %86 : vector<1x8x32xf32> to vector<8x32xf32>
    %88 = vector.shape_cast %85 : vector<8x32xf32> to vector<1x8x32xf32>
    tpu.vector_store %arg6[%c0_56, %c0_57, %c0_58], %88 {strides = array<i32>} : memref<1x8x32xf32, #tpu.memory_space<vmem>>, vector<1x8x32xf32>,
    return
  }
  func.func @transform_0(%arg0: i32) -> (i32, i32, i32) {
    %c0_i32 = arith.constant 0 : i32
    %c0_i32_0 = arith.constant 0 : i32
    %c0_i32_1 = arith.constant 0 : i32
    return %arg0, %c0_i32, %c0_i32_0 : i32, i32, i32
  }
  func.func @transform_1(%arg0: i32) -> (i32, i32) {
    %c0_i32 = arith.constant 0 : i32
    %c0_i32_0 = arith.constant 0 : i32
    %c0_i32_1 = arith.constant 0 : i32
    return %c0_i32, %c0_i32_0 : i32, i32
  }
  func.func @transform_2(%arg0: i32) -> (i32, i32) {
    %c0_i32 = arith.constant 0 : i32
    %c0_i32_0 = arith.constant 0 : i32
    %c0_i32_1 = arith.constant 0 : i32
    return %c0_i32, %c0_i32_0 : i32, i32
  }
  func.func @transform_3(%arg0: i32) -> (i32, i32) {
    %c0_i32 = arith.constant 0 : i32
    %c0_i32_0 = arith.constant 0 : i32
    %c0_i32_1 = arith.constant 0 : i32
    return %c0_i32, %c0_i32_0 : i32, i32
  }
  func.func @transform_4(%arg0: i32) -> (i32, i32) {
    %c0_i32 = arith.constant 0 : i32
    %c0_i32_0 = arith.constant 0 : i32
    %c0_i32_1 = arith.constant 0 : i32
    return %c0_i32, %c0_i32_0 : i32, i32
  }
  func.func @transform_5(%arg0: i32) -> (i32, i32, i32) {
    %c0_i32 = arith.constant 0 : i32
    %c0_i32_0 = arith.constant 0 : i32
    %c0_i32_1 = arith.constant 0 : i32
    return %arg0, %c0_i32, %c0_i32_0 : i32, i32, i32
  }
}

</mosaic_0001>

<llo_original>
// kernel: tpu_custom_call.1
$region0: #{tpu_custom_call.1}
  #allocation0 [shape = 'u32[]', space=smem, size = 0x4, offset = 0x4, fixed_abs, tag = 'smem constant byte address 0x4 - core index']
  #allocation1 [shape = 'u32[144,128]{1,0:T(1,128)}', space=vmem, size = 0x12000, scoped, tag = 'internal scratch']
  #allocation2 [shape = 'f32[8,96]{1,0:T(8,128)}', space=vmem, size = 0x1000, scoped, tag = 'scratch operand']
  #allocation3 [shape = 'f32[8,32]{1,0:T(8,128)}', space=vmem, size = 0x1000, scoped, tag = 'scratch operand']
  %s0 = inlined_call_operand.hbm [shape: f32[2,8,32], index: 0, kind: input, shape index: {}]
  %s1 = inlined_call_operand.hbm [shape: f32[32,96], index: 1, kind: input, shape index: {}]
  %s2 = inlined_call_operand.vmem [shape: f32[1,96], index: 2, kind: input, shape index: {}]
  %s3 = inlined_call_operand.hbm [shape: f32[32,32], index: 3, kind: input, shape index: {}]
  %s4 = inlined_call_operand.vmem [shape: f32[1,32], index: 4, kind: input, shape index: {}]
  %s5 = inlined_call_operand.hbm [shape: f32[2,8,32], index: 5, kind: output, shape index: {}]
  %s6 = sld [smem:[#allocation0]]
  $region65: #{tpu_custom_call.1} parent=0
    _
  %s8 = ssub.s32 1, %s6
  %s9 = scalar_select 0, %s8, %s6
  $region1: #{tpu_custom_call.1} parent=0
    #allocation4 [shape = 'u8[8192]{0}', space=vmem, size = 0x2000, scoped, tag = 'input window, operand 0']
    #allocation5 [shape = 's32[2]{0}', space=sflag, size = 0x8, scoped, tag = 'scoped memory for tpu_custom_call.1']
    #allocation6 [shape = 's32[2]{0}', space=sflag, size = 0x8, scoped, tag = 'scoped memory for tpu_custom_call.1']
    #allocation7 [shape = 'u8[16384]{0}', space=vmem, size = 0x4000, scoped, tag = 'input window, operand 1, single buffered']
    #allocation8 [shape = 's32[1]{0}', space=sflag, size = 0x4, scoped, tag = 'scoped memory for tpu_custom_call.1']
    #allocation9 [shape = 'u8[16384]{0}', space=vmem, size = 0x4000, scoped, tag = 'input window, operand 3, single buffered']
    #allocation10 [shape = 'u8[8192]{0}', space=vmem, size = 0x2000, scoped, tag = 'output window, operand 0']
    %10 = vsyncpa [#allocation5], 0
    %s11 = scalar_lea.sflag [#allocation5], 1
    %12 = vsyncpa %s11, 0
    %13 = vsyncpa [#allocation8], 0
    %14 = vsyncpa [#allocation6], 0
    %s15 = scalar_lea.sflag [#allocation6], 1
    %16 = vsyncpa %s15, 0
    loop: start=0, step=1, limit=4
    $region2: #{tpu_custom_call.1} parent=1 // loop_pre_header
      _
    $region3: #{tpu_custom_call.1} parent=1 // loop_header
      %s18 = sphi 0, %s22
      %p19 = scmp.ge.s32.totalorder %s18, 4
      %s28 = sphi 0, %s30
      %s31 = sphi 0, %s28
      %s32 = sphi 0, %s31
      %s48 = sphi 0, %s32
      %s52 = sphi 0, %s52
      %s54 = sphi 0, %s52
      %s55 = sphi 0, %s54
      %s69 = sphi 0, %s55
      %s73 = sphi 0, %s73
      %s75 = sphi 0, %s73
      %s76 = sphi 0, %s75
      %s90 = sphi 0, %s76
      %s94 = sphi 0, %s94
      %s96 = sphi 0, %s94
      %s97 = sphi 0, %s96
      %s111 = sphi 0, %s97
      %s115 = sphi 0, %s115
      %s117 = sphi 0, %s115
      %s118 = sphi 0, %s117
      %s132 = sphi 0, %s118
      %s138 = sphi 0, %s140
      %s141 = sphi 0, %s138
      %s142 = sphi 0, %s141
      %s158 = sphi 0, %s142
    $region4: #{tpu_custom_call.1} parent=1 // loop_header_branch
      %21 = sbr.rel (%p19) target = $region8
    $region5: #{tpu_custom_call.1} parent=1 // loop_body
      %s23 = ssub.s32 %s18, 1
      %s24 = ssub.s32 %s18, 2
      %s25 = sadd.s32 %s18, 1
      %s26 = ssub.s32 %s18, %s25
      %p27 = scmp.eq.s32.totalorder %s26, 0
      %s29 = sadd.s32 %s28, 1
      %s30 = scalar_select %p27, %s28, %s29
      %p33 = pneg %p27
      %p34 = scmp.eq.s32.totalorder %s18, 1
      %p35 = por %p33, %p34
      %p36 = scmp.ne.s32.totalorder %s28, %s31
      %p37 = scmp.eq.s32.totalorder %s18, 0
      %p38 = por %p36, %p37
      %p39 = scmp.ne.s32.totalorder %s28, %s31
      %p40 = scmp.eq.s32.totalorder %s23, 1
      %p41 = por %p39, %p40
      %p42 = scmp.ne.s32.totalorder %s31, %s32
      %p43 = scmp.eq.s32.totalorder %s23, 0
      %p44 = por %p42, %p43
      %p45 = scmp.ne.s32.totalorder %s31, %s32
      %p46 = scmp.eq.s32.totalorder %s24, 1
      %p47 = por %p45, %p46
      %p49 = scmp.ne.s32.totalorder %s32, %s48
      %p50 = scmp.eq.s32.totalorder %s24, 0
      %p51 = por %p49, %p50
      %s53 = sadd.s32 %s52, 1
      %p56 = scmp.eq.s32.totalorder %s18, 1
      %p57 = scmp.ne.s32.totalorder %s52, %s54
      %p58 = scmp.eq.s32.totalorder %s18, 0
      %p59 = por %p57, %p58
      %p60 = scmp.ne.s32.totalorder %s52, %s54
      %p61 = scmp.eq.s32.totalorder %s23, 1
      %p62 = por %p60, %p61
      %p63 = scmp.ne.s32.totalorder %s54, %s55
      %p64 = scmp.eq.s32.totalorder %s23, 0
      %p65 = por %p63, %p64
      %p66 = scmp.ne.s32.totalorder %s54, %s55
      %p67 = scmp.eq.s32.totalorder %s24, 1
      %p68 = por %p66, %p67
      %p70 = scmp.ne.s32.totalorder %s55, %s69
      %p71 = scmp.eq.s32.totalorder %s24, 0
      %p72 = por %p70, %p71
      %s74 = sadd.s32 %s73, 1
      %p77 = scmp.eq.s32.totalorder %s18, 1
      %p78 = scmp.ne.s32.totalorder %s73, %s75
      %p79 = scmp.eq.s32.totalorder %s18, 0
      %p80 = por %p78, %p79
      %p81 = scmp.ne.s32.totalorder %s73, %s75
      %p82 = scmp.eq.s32.totalorder %s23, 1
      %p83 = por %p81, %p82
      %p84 = scmp.ne.s32.totalorder %s75, %s76
      %p85 = scmp.eq.s32.totalorder %s23, 0
      %p86 = por %p84, %p85
      %p87 = scmp.ne.s32.totalorder %s75, %s76
      %p88 = scmp.eq.s32.totalorder %s24, 1
      %p89 = por %p87, %p88
      %p91 = scmp.ne.s32.totalorder %s76, %s90
      %p92 = scmp.eq.s32.totalorder %s24, 0
      %p93 = por %p91, %p92
      %s95 = sadd.s32 %s94, 1
      %p98 = scmp.eq.s32.totalorder %s18, 1
      %p99 = scmp.ne.s32.totalorder %s94, %s96
      %p100 = scmp.eq.s32.totalorder %s18, 0
      %p101 = por %p99, %p100
      %p102 = scmp.ne.s32.totalorder %s94, %s96
      %p103 = scmp.eq.s32.totalorder %s23, 1
      %p104 = por %p102, %p103
      %p105 = scmp.ne.s32.totalorder %s96, %s97
      %p106 = scmp.eq.s32.totalorder %s23, 0
      %p107 = por %p105, %p106
      %p108 = scmp.ne.s32.totalorder %s96, %s97
      %p109 = scmp.eq.s32.totalorder %s24, 1
      %p110 = por %p108, %p109
      %p112 = scmp.ne.s32.totalorder %s97, %s111
      %p113 = scmp.eq.s32.totalorder %s24, 0
      %p114 = por %p112, %p113
      %s116 = sadd.s32 %s115, 1
      %p119 = scmp.eq.s32.totalorder %s18, 1
      %p120 = scmp.ne.s32.totalorder %s115, %s117
      %p121 = scmp.eq.s32.totalorder %s18, 0
      %p122 = por %p120, %p121
      %p123 = scmp.ne.s32.totalorder %s115, %s117
      %p124 = scmp.eq.s32.totalorder %s23, 1
      %p125 = por %p123, %p124
      %p126 = scmp.ne.s32.totalorder %s117, %s118
      %p127 = scmp.eq.s32.totalorder %s23, 0
      %p128 = por %p126, %p127
      %p129 = scmp.ne.s32.totalorder %s117, %s118
      %p130 = scmp.eq.s32.totalorder %s24, 1
      %p131 = por %p129, %p130
      %p133 = scmp.ne.s32.totalorder %s118, %s132
      %p134 = scmp.eq.s32.totalorder %s24, 0
      %p135 = por %p133, %p134
      %s136 = ssub.s32 %s18, %s25
      %p137 = scmp.eq.s32.totalorder %s136, 0
      %s139 = sadd.s32 %s138, 1
      %s140 = scalar_select %p137, %s138, %s139
      %p143 = pneg %p137
      %p144 = scmp.eq.s32.totalorder %s18, 1
      %p145 = por %p143, %p144
      %p146 = scmp.ne.s32.totalorder %s138, %s141
      %p147 = scmp.eq.s32.totalorder %s18, 0
      %p148 = por %p146, %p147
      %p149 = scmp.ne.s32.totalorder %s138, %s141
      %p150 = scmp.eq.s32.totalorder %s23, 1
      %p151 = por %p149, %p150
      %p152 = scmp.ne.s32.totalorder %s141, %s142
      %p153 = scmp.eq.s32.totalorder %s23, 0
      %p154 = por %p152, %p153
      %p155 = scmp.ne.s32.totalorder %s141, %s142
      %p156 = scmp.eq.s32.totalorder %s24, 1
      %p157 = por %p155, %p156
      %p159 = scmp.ne.s32.totalorder %s142, %s158
      %p160 = scmp.eq.s32.totalorder %s24, 0
      %p161 = por %p159, %p160
      %p162 = scmp.le.s32.totalorder 1, %s18
      %p163 = scmp.lt.s32.totalorder %s18, 3
      %p164 = pnand %p162, %p163
      %p165 = pneg %p164
      // Predicated region
      $region9: #{tpu_custom_call.1} parent=5 // pred_check
        _
      $region10: #{tpu_custom_call.1} parent=5 // pred_check_branch
        %167 = sbr.rel (%p164) target = $region12
      $region11: #{tpu_custom_call.1} parent=5 // pred_region
        %s168 = ssub.s32 %s18, 1
        // Predicated region
        $region13: #{tpu_custom_call.1} parent=11 // pred_check
          %p169 = pneg %p65
        $region14: #{tpu_custom_call.1} parent=11 // pred_check_branch
          %171 = sbr.rel (%p169) target = $region16
        $region15: #{tpu_custom_call.1} parent=11 // pred_region
          %s173 = ssub.s32 512, 512
          %174 = vsyncadd [#allocation8], %s173
          %s175 = sshll.u32 [#allocation7], 4
          %s176 = int_to_ptr.vmem [resolvable:$true] %s175
          %181 = dma.hbm_to_vmem [thread:$0]  %s1, 512, %s176, [#allocation8], 128, 128, 8
        $region16: #{tpu_custom_call.1} parent=11 // pred_fallthru
          _
        // Predicated region
        $region17: #{tpu_custom_call.1} parent=11 // pred_check
          %p182 = pneg %p86
        $region18: #{tpu_custom_call.1} parent=11 // pred_check_branch
          %184 = sbr.rel (%p182) target = $region20
        $region19: #{tpu_custom_call.1} parent=11 // pred_region
          _
        $region20: #{tpu_custom_call.1} parent=11 // pred_fallthru
          _
        // Predicated region
        $region21: #{tpu_custom_call.1} parent=11 // pred_check
          %p185 = pneg %p107
        $region22: #{tpu_custom_call.1} parent=11 // pred_check_branch
          %187 = sbr.rel (%p185) target = $region24
        $region23: #{tpu_custom_call.1} parent=11 // pred_region
          %s189 = ssub.s32 512, 512
          %190 = vsyncadd [#allocation8], %s189
          %s191 = sshll.u32 [#allocation9], 4
          %s192 = int_to_ptr.vmem [resolvable:$true] %s191
          %197 = dma.hbm_to_vmem [thread:$0]  %s3, 512, %s192, [#allocation8], 128, 128, 8
        $region24: #{tpu_custom_call.1} parent=11 // pred_fallthru
          _
        // Predicated region
        $region25: #{tpu_custom_call.1} parent=11 // pred_check
          %p198 = pneg %p128
        $region26: #{tpu_custom_call.1} parent=11 // pred_check_branch
          %200 = sbr.rel (%p198) target = $region28
        $region27: #{tpu_custom_call.1} parent=11 // pred_region
          _
        $region28: #{tpu_custom_call.1} parent=11 // pred_fallthru
          _
      $region12: #{tpu_custom_call.1} parent=5 // pred_fallthru
        _
      %p201 = scmp.lt.s32.totalorder %s18, 2
      // Predicated region
      $region29: #{tpu_custom_call.1} parent=5 // pred_check
        %p202 = pneg %p201
      $region30: #{tpu_custom_call.1} parent=5 // pred_check_branch
        %204 = sbr.rel (%p202) target = $region32
      $region31: #{tpu_custom_call.1} parent=5 // pred_region
        // Predicated region
        $region33: #{tpu_custom_call.1} parent=31 // pred_check
          %p205 = pneg %p38
        $region34: #{tpu_custom_call.1} parent=31 // pred_check_branch
          %207 = sbr.rel (%p205) target = $region36
        $region35: #{tpu_custom_call.1} parent=31 // pred_region
          %s208 = sand.u32 %s28, 1
          %s209 = scalar_lea.sflag [#allocation5], %s208
          %s210 = sand.u32 %s28, 1
          %s211 = smul.addr %s210, 8
          %s212 = scalar_lea.vmem [#allocation4], %s211
          %s214 = ssub.s32 128, 128
          %215 = vsyncadd %s209, %s214
          %s216 = smul.addr %s18, 128
          %s217 = scalar_lea.hbm %s0, %s216
          %s219 = sshll.u32 %s212, 4
          %s220 = int_to_ptr.vmem [resolvable:$true] %s219
          %222 = dma.hbm_to_vmem [thread:$0]  %s217, 128, %s220, %s209
        $region36: #{tpu_custom_call.1} parent=31 // pred_fallthru
          _
      $region32: #{tpu_custom_call.1} parent=5 // pred_fallthru
        _
      %p223 = scmp.le.s32.totalorder 1, %s18
      %p224 = scmp.lt.s32.totalorder %s18, 3
      %p225 = pnand %p223, %p224
      %p226 = pneg %p225
      // Predicated region
      $region37: #{tpu_custom_call.1} parent=5 // pred_check
        _
      $region38: #{tpu_custom_call.1} parent=5 // pred_check_branch
        %228 = sbr.rel (%p225) target = $region40
      $region39: #{tpu_custom_call.1} parent=5 // pred_region
        %s229 = ssub.s32 %s18, 1
        %s230 = sand.u32 %s31, 1
        %s231 = scalar_lea.sflag [#allocation5], %s230
        %s232 = sand.u32 %s31, 1
        %s233 = smul.addr %s232, 8
        %s234 = scalar_lea.vmem [#allocation4], %s233
        // Predicated region
        $region41: #{tpu_custom_call.1} parent=39 // pred_check
          %p235 = pneg %p44
        $region42: #{tpu_custom_call.1} parent=39 // pred_check_branch
          %237 = sbr.rel (%p235) target = $region44
        $region43: #{tpu_custom_call.1} parent=39 // pred_region
          %238 = dma.done %s231, 128
        $region44: #{tpu_custom_call.1} parent=39 // pred_fallthru
          _
        // Predicated region
        $region45: #{tpu_custom_call.1} parent=39 // pred_check
          %p239 = pneg %p65
        $region46: #{tpu_custom_call.1} parent=39 // pred_check_branch
          %241 = sbr.rel (%p239) target = $region48
        $region47: #{tpu_custom_call.1} parent=39 // pred_region
          %242 = dma.done [#allocation8], 512
        $region48: #{tpu_custom_call.1} parent=39 // pred_fallthru
          _
        // Predicated region
        $region49: #{tpu_custom_call.1} parent=39 // pred_check
          %p243 = pneg %p107
        $region50: #{tpu_custom_call.1} parent=39 // pred_check_branch
          %245 = sbr.rel (%p243) target = $region52
        $region51: #{tpu_custom_call.1} parent=39 // pred_region
          %246 = dma.done [#allocation8], 512
        $region52: #{tpu_custom_call.1} parent=39 // pred_fallthru
          _
        %s247 = sand.u32 %s31, 1
        %s248 = scalar_lea.sflag [#allocation5], %s247
        %s249 = sand.u32 %s31, 1
        %s250 = smul.addr %s249, 8
        %s251 = scalar_lea.vmem [#allocation4], %s250
        %p252 = pneg %p44
        %p253 = pneg %p41
        %p254 = pneg %p65
        %p255 = pneg %p62
        %p256 = pneg %p86
        %p257 = pneg %p83
        %p258 = pneg %p107
        %p259 = pneg %p104
        %p260 = pneg %p128
        %p261 = pneg %p125
        %p262 = pneg %p154
        %p263 = pneg %p151
        %s264 = sand.u32 %s141, 1
        %s265 = scalar_lea.sflag [#allocation6], %s264
        %s266 = sand.u32 %s141, 1
        %s267 = smul.addr %s266, 8
        %s268 = scalar_lea.vmem [#allocation10], %s267
        %v269 = vld [vmem:[%s234] sm:$0xff]
        %v270 = vld [vmem:[#allocation7] sm:$0xff]
        %v271 = vld [vmem:[#allocation7 + $0x8] sm:$0xff]
        %v272 = vld [vmem:[#allocation7 + $0x10] sm:$0xff]
        %v273 = vld [vmem:[#allocation7 + $0x18] sm:$0xff]
        %v274 = vld [vmem:[%s2] sm:$0x1]
        %v276 = vlaneseq
        %v277 = vshrl.u32 %v276, 7
        %v278 = vsub.s32 0, %v277
        %v279 = vrot.slane %v274, %v278
        %vm281 = vcmask 261120
        %v283 = vsel %vm281, %v269, 0
        %285 = vmatprep.subr.mxu0 0.0
        %286 = vmatpush1.msra.mxu0 %v270
        %287 = vmatprep.subr.mxu0 0.0
        %288 = vmatpush1.msra.mxu0 %v271
        %289 = vmatprep.subr.mxu0 0.0
        %290 = vmatpush1.msra.mxu0 %v272
        %291 = vmatprep.subr.mxu0 0.0
        %292 = vmatpush1.msra.mxu0 %v273
        %293 = vmatprep.subr.mxu0 0.0
        %294 = vmatpush1.msra.mxu0 0.0
        %295 = vmatprep.subr.mxu0 0.0
        %296 = vmatpush1.msra.mxu0 0.0
        %297 = vmatprep.subr.mxu0 0.0
        %298 = vmatpush1.msra.mxu0 0.0
        %299 = vmatprep.subr.mxu0 0.0
        %300 = vmatpush1.msra.mxu0 0.0
        %301 = vmatprep.subr.mxu0 0.0
        %302 = vmatpush1.msra.mxu0 0.0
        %303 = vmatprep.subr.mxu0 0.0
        %304 = vmatpush1.msra.mxu0 0.0
        %305 = vmatprep.subr.mxu0 0.0
        %306 = vmatpush1.msra.mxu0 0.0
        %307 = vmatprep.subr.mxu0 0.0
        %308 = vmatpush1.msra.mxu0 0.0
        %309 = vmatprep.subr.mxu0 0.0
        %310 = vmatpush1.msra.mxu0 0.0
        %311 = vmatprep.subr.mxu0 0.0
        %312 = vmatpush1.msra.mxu0 0.0
        %313 = vmatprep.subr.mxu0 0.0
        %314 = vmatpush1.msra.mxu0 0.0
        %315 = vmatprep.subr.mxu0 0.0
        %316 = vmatpush1.msra.mxu0 0.0
        %317 = vmatprep.subr.mxu0 0.0
        %318 = vmatpush1.msra.mxu0 0.0
        %319 = vmatprep.subr.mxu0 0.0
        %320 = vmatpush1.msra.mxu0 0.0
        %321 = vmatprep.subr.mxu0 0.0
        %322 = vmatpush1.msra.mxu0 0.0
        %323 = vmatprep.subr.mxu0 0.0
        %324 = vmatpush1.msra.mxu0 0.0
        %325 = vmatprep.subr.mxu0 0.0
        %326 = vmatpush1.msra.mxu0 0.0
        %327 = vmatprep.subr.mxu0 0.0
        %328 = vmatpush1.msra.mxu0 0.0
        %329 = vmatprep.subr.mxu0 0.0
        %330 = vmatpush1.msra.mxu0 0.0
        %331 = vmatprep.subr.mxu0 0.0
        %332 = vmatpush1.msra.mxu0 0.0
        %333 = vmatprep.subr.mxu0 0.0
        %334 = vmatpush1.msra.mxu0 0.0
        %335 = vmatprep.subr.mxu0 0.0
        %336 = vmatpush1.msra.mxu0 0.0
        %337 = vmatprep.subr.mxu0 0.0
        %338 = vmatpush1.msra.mxu0 0.0
        %339 = vmatprep.subr.mxu0 0.0
        %340 = vmatpush1.msra.mxu0 0.0
        %341 = vmatprep.subr.mxu0 0.0
        %342 = vmatpush1.msra.mxu0 0.0
        %343 = vmatprep.subr.mxu0 0.0
        %344 = vmatpush1.msra.mxu0 0.0
        %345 = vmatprep.subr.mxu0 0.0
        %346 = vmatpush1.msra.mxu0 0.0
        %347 = vmatprep.subr.mxu0 0.0
        %348 = vmatpush1.msra.mxu0 0.0
        %349 = vmatprep.mubr.f32.mxu0 0.0
        %350 = vmatmul.mubr.f32.gmra.mrb[0].mxu0 %v283
        %v351 = vpop.f32.mrb[0].mxu0
        %v352 = vadd.f32 %v279, %v351
        %v353 = vpop.f32.mrb[0].mxu0
        %354 = vdwg.mxu0
        %vm355 = vcmask 785408
        %356 = vst.msk [vmem:[#allocation2] sm:$0xff] %vm355, %v352
        %v357 = vld [vmem:[#allocation2] sm:$0xff]
        %359 = vrot.lane.b32.xlu0 %v357, 96
        %v360 = vpop.permute.xlu0 %359
        %vm361 = vcmask 64512
        %v362 = vsel %vm361, %v357, 0
        %v364 = vsel %vm361, %v360, 0
        %366 = vmatprep.subr.mxu0 0.0
        %367 = vmatpush1.xpose.msra.mxu0 %v364
        %368 = vmatprep.subr.mxu0 0.0
        %369 = vmatpush1.xpose.msra.mxu0 0.0
        %370 = vmatprep.subr.mxu0 0.0
        %371 = vmatpush1.xpose.msra.mxu0 0.0
        %372 = vmatprep.subr.mxu0 0.0
        %373 = vmatpush1.xpose.msra.mxu0 0.0
        %374 = vmatprep.subr.mxu0 0.0
        %375 = vmatpush1.xpose.msra.mxu0 0.0
        %376 = vmatprep.subr.mxu0 0.0
        %377 = vmatpush1.xpose.msra.mxu0 0.0
        %378 = vmatprep.subr.mxu0 0.0
        %379 = vmatpush1.xpose.msra.mxu0 0.0
        %380 = vmatprep.subr.mxu0 0.0
        %381 = vmatpush1.xpose.msra.mxu0 0.0
        %382 = vmatprep.subr.mxu0 0.0
        %383 = vmatpush1.xpose.msra.mxu0 0.0
        %384 = vmatprep.subr.mxu0 0.0
        %385 = vmatpush1.xpose.msra.mxu0 0.0
        %386 = vmatprep.subr.mxu0 0.0
        %387 = vmatpush1.xpose.msra.mxu0 0.0
        %388 = vmatprep.subr.mxu0 0.0
        %389 = vmatpush1.xpose.msra.mxu0 0.0
        %390 = vmatprep.subr.mxu0 0.0
        %391 = vmatpush1.xpose.msra.mxu0 0.0
        %392 = vmatprep.subr.mxu0 0.0
        %393 = vmatpush1.xpose.msra.mxu0 0.0
        %394 = vmatprep.subr.mxu0 0.0
        %395 = vmatpush1.xpose.msra.mxu0 0.0
        %396 = vmatprep.subr.mxu0 0.0
        %397 = vmatpush1.xpose.msra.mxu0 0.0
        %398 = vmatprep.subr.mxu0 0.0
        %399 = vmatpush1.xpose.msra.mxu0 0.0
        %400 = vmatprep.subr.mxu0 0.0
        %401 = vmatpush1.xpose.msra.mxu0 0.0
        %402 = vmatprep.subr.mxu0 0.0
        %403 = vmatpush1.xpose.msra.mxu0 0.0
        %404 = vmatprep.subr.mxu0 0.0
        %405 = vmatpush1.xpose.msra.mxu0 0.0
        %406 = vmatprep.subr.mxu0 0.0
        %407 = vmatpush1.xpose.msra.mxu0 0.0
        %408 = vmatprep.subr.mxu0 0.0
        %409 = vmatpush1.xpose.msra.mxu0 0.0
        %410 = vmatprep.subr.mxu0 0.0
        %411 = vmatpush1.xpose.msra.mxu0 0.0
        %412 = vmatprep.subr.mxu0 0.0
        %413 = vmatpush1.xpose.msra.mxu0 0.0
        %414 = vmatprep.subr.mxu0 0.0
        %415 = vmatpush1.xpose.msra.mxu0 0.0
        %416 = vmatprep.subr.mxu0 0.0
        %417 = vmatpush1.xpose.msra.mxu0 0.0
        %418 = vmatprep.subr.mxu0 0.0
        %419 = vmatpush1.xpose.msra.mxu0 0.0
        %420 = vmatprep.subr.mxu0 0.0
        %421 = vmatpush1.xpose.msra.mxu0 0.0
        %422 = vmatprep.subr.mxu0 0.0
        %423 = vmatpush1.xpose.msra.mxu0 0.0
        %424 = vmatprep.subr.mxu0 0.0
        %425 = vmatpush1.xpose.msra.mxu0 0.0
        %426 = vmatprep.subr.mxu0 0.0
        %427 = vmatpush1.xpose.msra.mxu0 0.0
        %428 = vmatprep.subr.mxu0 0.0
        %429 = vmatpush1.xpose.msra.mxu0 0.0
        %430 = vmatprep.mubr.f32.mxu0 0.0
        %431 = vmatmul.mubr.f32.gmra.mrb[0].mxu0 %v362
        %v432 = vpop.f32.mrb[0].mxu0
        %v433 = vadd.f32 0.0, %v432
        %v434 = vpop.f32.mrb[0].mxu0
        %435 = vdwg.mxu0
        %v436 = vsel %vm361, %v433, -inf
        %437 = vmax.xlane.f32.xlu0 %v436
        %v438 = vpop.xlane.xlu0 %437
        %v439 = vsub.f32 %v433, %v438
        %v440 = vmul.f32 %v439, 1.442695
        %v441 = vpow.pop %v440
        %v442 = vsel %vm361, %v441, 0.0
        %443 = vadd.xlane.f32.xlu0 %v442
        %v444 = vpop.xlane.xlu0 %443
        %445 = vrot.lane.b32.xlu0 %v357, 64
        %v446 = vpop.permute.xlu0 %445
        %v449 = vsel %vm361, %v441, 0
        %451 = vmatprep.subr.mxu0 0.0
        %452 = vmatpush1.msra.mxu0 %v446
        %453 = vmatprep.subr.mxu0 0.0
        %454 = vmatpush1.msra.mxu0 0.0
        %455 = vmatprep.subr.mxu0 0.0
        %456 = vmatpush1.msra.mxu0 0.0
        %457 = vmatprep.subr.mxu0 0.0
        %458 = vmatpush1.msra.mxu0 0.0
        %459 = vmatprep.subr.mxu0 0.0
        %460 = vmatpush1.msra.mxu0 0.0
        %461 = vmatprep.subr.mxu0 0.0
        %462 = vmatpush1.msra.mxu0 0.0
        %463 = vmatprep.subr.mxu0 0.0
        %464 = vmatpush1.msra.mxu0 0.0
        %465 = vmatprep.subr.mxu0 0.0
        %466 = vmatpush1.msra.mxu0 0.0
        %467 = vmatprep.subr.mxu0 0.0
        %468 = vmatpush1.msra.mxu0 0.0
        %469 = vmatprep.subr.mxu0 0.0
        %470 = vmatpush1.msra.mxu0 0.0
        %471 = vmatprep.subr.mxu0 0.0
        %472 = vmatpush1.msra.mxu0 0.0
        %473 = vmatprep.subr.mxu0 0.0
        %474 = vmatpush1.msra.mxu0 0.0
        %475 = vmatprep.subr.mxu0 0.0
        %476 = vmatpush1.msra.mxu0 0.0
        %477 = vmatprep.subr.mxu0 0.0
        %478 = vmatpush1.msra.mxu0 0.0
        %479 = vmatprep.subr.mxu0 0.0
        %480 = vmatpush1.msra.mxu0 0.0
        %481 = vmatprep.subr.mxu0 0.0
        %482 = vmatpush1.msra.mxu0 0.0
        %483 = vmatprep.subr.mxu0 0.0
        %484 = vmatpush1.msra.mxu0 0.0
        %485 = vmatprep.subr.mxu0 0.0
        %486 = vmatpush1.msra.mxu0 0.0
        %487 = vmatprep.subr.mxu0 0.0
        %488 = vmatpush1.msra.mxu0 0.0
        %489 = vmatprep.subr.mxu0 0.0
        %490 = vmatpush1.msra.mxu0 0.0
        %491 = vmatprep.subr.mxu0 0.0
        %492 = vmatpush1.msra.mxu0 0.0
        %493 = vmatprep.subr.mxu0 0.0
        %494 = vmatpush1.msra.mxu0 0.0
        %495 = vmatprep.subr.mxu0 0.0
        %496 = vmatpush1.msra.mxu0 0.0
        %497 = vmatprep.subr.mxu0 0.0
        %498 = vmatpush1.msra.mxu0 0.0
        %499 = vmatprep.subr.mxu0 0.0
        %500 = vmatpush1.msra.mxu0 0.0
        %501 = vmatprep.subr.mxu0 0.0
        %502 = vmatpush1.msra.mxu0 0.0
        %503 = vmatprep.subr.mxu0 0.0
        %504 = vmatpush1.msra.mxu0 0.0
        %505 = vmatprep.subr.mxu0 0.0
        %506 = vmatpush1.msra.mxu0 0.0
        %507 = vmatprep.subr.mxu0 0.0
        %508 = vmatpush1.msra.mxu0 0.0
        %509 = vmatprep.subr.mxu0 0.0
        %510 = vmatpush1.msra.mxu0 0.0
        %511 = vmatprep.subr.mxu0 0.0
        %512 = vmatpush1.msra.mxu0 0.0
        %513 = vmatprep.subr.mxu0 0.0
        %514 = vmatpush1.msra.mxu0 0.0
        %515 = vmatprep.mubr.f32.mxu0 0.0
        %516 = vmatmul.mubr.f32.gmra.mrb[0].mxu0 %v449
        %v517 = vpop.f32.mrb[0].mxu0
        %v518 = vadd.f32 0.0, %v517
        %v519 = vpop.f32.mrb[0].mxu0
        %520 = vdwg.mxu0
        %v521 = vrcp.pop %v444
        %v522 = vmul.f32 %v521, 0.17677669
        %v523 = vmul.f32 %v518, %v522
        %524 = vst.msk [vmem:[#allocation3] sm:$0xff] %vm361, %v523
        %v525 = vld [vmem:[#allocation2] sm:$0xff]
        %527 = vrot.lane.b32.xlu0 %v525, 120
        %v528 = vpop.permute.xlu0 %527
        %529 = vrot.lane.b32.xlu0 %v525, 88
        %v530 = vpop.permute.xlu0 %529
        %v531 = vsel %vm361, %v528, 0
        %v533 = vsel %vm361, %v530, 0
        %535 = vmatprep.subr.mxu0 0.0
        %536 = vmatpush1.xpose.msra.mxu0 %v533
        %537 = vmatprep.subr.mxu0 0.0
        %538 = vmatpush1.xpose.msra.mxu0 0.0
        %539 = vmatprep.subr.mxu0 0.0
        %540 = vmatpush1.xpose.msra.mxu0 0.0
        %541 = vmatprep.subr.mxu0 0.0
        %542 = vmatpush1.xpose.msra.mxu0 0.0
        %543 = vmatprep.subr.mxu0 0.0
        %544 = vmatpush1.xpose.msra.mxu0 0.0
        %545 = vmatprep.subr.mxu0 0.0
        %546 = vmatpush1.xpose.msra.mxu0 0.0
        %547 = vmatprep.subr.mxu0 0.0
        %548 = vmatpush1.xpose.msra.mxu0 0.0
        %549 = vmatprep.subr.mxu0 0.0
        %550 = vmatpush1.xpose.msra.mxu0 0.0
        %551 = vmatprep.subr.mxu0 0.0
        %552 = vmatpush1.xpose.msra.mxu0 0.0
        %553 = vmatprep.subr.mxu0 0.0
        %554 = vmatpush1.xpose.msra.mxu0 0.0
        %555 = vmatprep.subr.mxu0 0.0
        %556 = vmatpush1.xpose.msra.mxu0 0.0
        %557 = vmatprep.subr.mxu0 0.0
        %558 = vmatpush1.xpose.msra.mxu0 0.0
        %559 = vmatprep.subr.mxu0 0.0
        %560 = vmatpush1.xpose.msra.mxu0 0.0
        %561 = vmatprep.subr.mxu0 0.0
        %562 = vmatpush1.xpose.msra.mxu0 0.0
        %563 = vmatprep.subr.mxu0 0.0
        %564 = vmatpush1.xpose.msra.mxu0 0.0
        %565 = vmatprep.subr.mxu0 0.0
        %566 = vmatpush1.xpose.msra.mxu0 0.0
        %567 = vmatprep.subr.mxu0 0.0
        %568 = vmatpush1.xpose.msra.mxu0 0.0
        %569 = vmatprep.subr.mxu0 0.0
        %570 = vmatpush1.xpose.msra.mxu0 0.0
        %571 = vmatprep.subr.mxu0 0.0
        %572 = vmatpush1.xpose.msra.mxu0 0.0
        %573 = vmatprep.subr.mxu0 0.0
        %574 = vmatpush1.xpose.msra.mxu0 0.0
        %575 = vmatprep.subr.mxu0 0.0
        %576 = vmatpush1.xpose.msra.mxu0 0.0
        %577 = vmatprep.subr.mxu0 0.0
        %578 = vmatpush1.xpose.msra.mxu0 0.0
        %579 = vmatprep.subr.mxu0 0.0
        %580 = vmatpush1.xpose.msra.mxu0 0.0
        %581 = vmatprep.subr.mxu0 0.0
        %582 = vmatpush1.xpose.msra.mxu0 0.0
        %583 = vmatprep.subr.mxu0 0.0
        %584 = vmatpush1.xpose.msra.mxu0 0.0
        %585 = vmatprep.subr.mxu0 0.0
        %586 = vmatpush1.xpose.msra.mxu0 0.0
        %587 = vmatprep.subr.mxu0 0.0
        %588 = vmatpush1.xpose.msra.mxu0 0.0
        %589 = vmatprep.subr.mxu0 0.0
        %590 = vmatpush1.xpose.msra.mxu0 0.0
        %591 = vmatprep.subr.mxu0 0.0
        %592 = vmatpush1.xpose.msra.mxu0 0.0
        %593 = vmatprep.subr.mxu0 0.0
        %594 = vmatpush1.xpose.msra.mxu0 0.0
        %595 = vmatprep.subr.mxu0 0.0
        %596 = vmatpush1.xpose.msra.mxu0 0.0
        %597 = vmatprep.subr.mxu0 0.0
        %598 = vmatpush1.xpose.msra.mxu0 0.0
        %599 = vmatprep.mubr.f32.mxu0 0.0
        %600 = vmatmul.mubr.f32.gmra.mrb[0].mxu0 %v531
        %v601 = vpop.f32.mrb[0].mxu0
        %v602 = vadd.f32 0.0, %v601
        %v603 = vpop.f32.mrb[0].mxu0
        %604 = vdwg.mxu0
        %v605 = vsel %vm361, %v602, -inf
        %606 = vmax.xlane.f32.xlu0 %v605
        %v607 = vpop.xlane.xlu0 %606
        %v608 = vsub.f32 %v602, %v607
        %v609 = vmul.f32 %v608, 1.442695
        %v610 = vpow.pop %v609
        %v611 = vsel %vm361, %v610, 0.0
        %612 = vadd.xlane.f32.xlu0 %v611
        %v613 = vpop.xlane.xlu0 %612
        %614 = vrot.lane.b32.xlu0 %v525, 56
        %v615 = vpop.permute.xlu0 %614
        %v618 = vsel %vm361, %v610, 0
        %620 = vmatprep.subr.mxu0 0.0
        %621 = vmatpush1.msra.mxu0 %v615
        %622 = vmatprep.subr.mxu0 0.0
        %623 = vmatpush1.msra.mxu0 0.0
        %624 = vmatprep.subr.mxu0 0.0
        %625 = vmatpush1.msra.mxu0 0.0
        %626 = vmatprep.subr.mxu0 0.0
        %627 = vmatpush1.msra.mxu0 0.0
        %628 = vmatprep.subr.mxu0 0.0
        %629 = vmatpush1.msra.mxu0 0.0
        %630 = vmatprep.subr.mxu0 0.0
        %631 = vmatpush1.msra.mxu0 0.0
        %632 = vmatprep.subr.mxu0 0.0
        %633 = vmatpush1.msra.mxu0 0.0
        %634 = vmatprep.subr.mxu0 0.0
        %635 = vmatpush1.msra.mxu0 0.0
        %636 = vmatprep.subr.mxu0 0.0
        %637 = vmatpush1.msra.mxu0 0.0
        %638 = vmatprep.subr.mxu0 0.0
        %639 = vmatpush1.msra.mxu0 0.0
        %640 = vmatprep.subr.mxu0 0.0
        %641 = vmatpush1.msra.mxu0 0.0
        %642 = vmatprep.subr.mxu0 0.0
        %643 = vmatpush1.msra.mxu0 0.0
        %644 = vmatprep.subr.mxu0 0.0
        %645 = vmatpush1.msra.mxu0 0.0
        %646 = vmatprep.subr.mxu0 0.0
        %647 = vmatpush1.msra.mxu0 0.0
        %648 = vmatprep.subr.mxu0 0.0
        %649 = vmatpush1.msra.mxu0 0.0
        %650 = vmatprep.subr.mxu0 0.0
        %651 = vmatpush1.msra.mxu0 0.0
        %652 = vmatprep.subr.mxu0 0.0
        %653 = vmatpush1.msra.mxu0 0.0
        %654 = vmatprep.subr.mxu0 0.0
        %655 = vmatpush1.msra.mxu0 0.0
        %656 = vmatprep.subr.mxu0 0.0
        %657 = vmatpush1.msra.mxu0 0.0
        %658 = vmatprep.subr.mxu0 0.0
        %659 = vmatpush1.msra.mxu0 0.0
        %660 = vmatprep.subr.mxu0 0.0
        %661 = vmatpush1.msra.mxu0 0.0
        %662 = vmatprep.subr.mxu0 0.0
        %663 = vmatpush1.msra.mxu0 0.0
        %664 = vmatprep.subr.mxu0 0.0
        %665 = vmatpush1.msra.mxu0 0.0
        %666 = vmatprep.subr.mxu0 0.0
        %667 = vmatpush1.msra.mxu0 0.0
        %668 = vmatprep.subr.mxu0 0.0
        %669 = vmatpush1.msra.mxu0 0.0
        %670 = vmatprep.subr.mxu0 0.0
        %671 = vmatpush1.msra.mxu0 0.0
        %672 = vmatprep.subr.mxu0 0.0
        %673 = vmatpush1.msra.mxu0 0.0
        %674 = vmatprep.subr.mxu0 0.0
        %675 = vmatpush1.msra.mxu0 0.0
        %676 = vmatprep.subr.mxu0 0.0
        %677 = vmatpush1.msra.mxu0 0.0
        %678 = vmatprep.subr.mxu0 0.0
        %679 = vmatpush1.msra.mxu0 0.0
        %680 = vmatprep.subr.mxu0 0.0
        %681 = vmatpush1.msra.mxu0 0.0
        %682 = vmatprep.subr.mxu0 0.0
        %683 = vmatpush1.msra.mxu0 0.0
        %684 = vmatprep.mubr.f32.mxu0 0.0
        %685 = vmatmul.mubr.f32.gmra.mrb[0].mxu0 %v618
        %v686 = vpop.f32.mrb[0].mxu0
        %v687 = vadd.f32 0.0, %v686
        %v688 = vpop.f32.mrb[0].mxu0
        %689 = vdwg.mxu0
        %v690 = vrcp.pop %v613
        %v691 = vmul.f32 %v690, 0.17677669
        %v692 = vmul.f32 %v687, %v691
        %694 = vrot.lane.b32.xlu0 %v692, 8
        %v695 = vpop.permute.xlu0 %694
        %vm697 = vcmask 130112
        %698 = vst.msk [vmem:[#allocation3] sm:$0xff] %vm697, %v695
        %v699 = vld [vmem:[#allocation2] sm:$0xff]
        %701 = vrot.lane.b32.xlu0 %v699, 112
        %v702 = vpop.permute.xlu0 %701
        %703 = vrot.lane.b32.xlu0 %v699, 80
        %v704 = vpop.permute.xlu0 %703
        %v705 = vsel %vm361, %v702, 0
        %v707 = vsel %vm361, %v704, 0
        %709 = vmatprep.subr.mxu0 0.0
        %710 = vmatpush1.xpose.msra.mxu0 %v707
        %711 = vmatprep.subr.mxu0 0.0
        %712 = vmatpush1.xpose.msra.mxu0 0.0
        %713 = vmatprep.subr.mxu0 0.0
        %714 = vmatpush1.xpose.msra.mxu0 0.0
        %715 = vmatprep.subr.mxu0 0.0
        %716 = vmatpush1.xpose.msra.mxu0 0.0
        %717 = vmatprep.subr.mxu0 0.0
        %718 = vmatpush1.xpose.msra.mxu0 0.0
        %719 = vmatprep.subr.mxu0 0.0
        %720 = vmatpush1.xpose.msra.mxu0 0.0
        %721 = vmatprep.subr.mxu0 0.0
        %722 = vmatpush1.xpose.msra.mxu0 0.0
        %723 = vmatprep.subr.mxu0 0.0
        %724 = vmatpush1.xpose.msra.mxu0 0.0
        %725 = vmatprep.subr.mxu0 0.0
        %726 = vmatpush1.xpose.msra.mxu0 0.0
        %727 = vmatprep.subr.mxu0 0.0
        %728 = vmatpush1.xpose.msra.mxu0 0.0
        %729 = vmatprep.subr.mxu0 0.0
        %730 = vmatpush1.xpose.msra.mxu0 0.0
        %731 = vmatprep.subr.mxu0 0.0
        %732 = vmatpush1.xpose.msra.mxu0 0.0
        %733 = vmatprep.subr.mxu0 0.0
        %734 = vmatpush1.xpose.msra.mxu0 0.0
        %735 = vmatprep.subr.mxu0 0.0
        %736 = vmatpush1.xpose.msra.mxu0 0.0
        %737 = vmatprep.subr.mxu0 0.0
        %738 = vmatpush1.xpose.msra.mxu0 0.0
        %739 = vmatprep.subr.mxu0 0.0
        %740 = vmatpush1.xpose.msra.mxu0 0.0
        %741 = vmatprep.subr.mxu0 0.0
        %742 = vmatpush1.xpose.msra.mxu0 0.0
        %743 = vmatprep.subr.mxu0 0.0
        %744 = vmatpush1.xpose.msra.mxu0 0.0
        %745 = vmatprep.subr.mxu0 0.0
        %746 = vmatpush1.xpose.msra.mxu0 0.0
        %747 = vmatprep.subr.mxu0 0.0
        %748 = vmatpush1.xpose.msra.mxu0 0.0
        %749 = vmatprep.subr.mxu0 0.0
        %750 = vmatpush1.xpose.msra.mxu0 0.0
        %751 = vmatprep.subr.mxu0 0.0
        %752 = vmatpush1.xpose.msra.mxu0 0.0
        %753 = vmatprep.subr.mxu0 0.0
        %754 = vmatpush1.xpose.msra.mxu0 0.0
        %755 = vmatprep.subr.mxu0 0.0
        %756 = vmatpush1.xpose.msra.mxu0 0.0
        %757 = vmatprep.subr.mxu0 0.0
        %758 = vmatpush1.xpose.msra.mxu0 0.0
        %759 = vmatprep.subr.mxu0 0.0
        %760 = vmatpush1.xpose.msra.mxu0 0.0
        %761 = vmatprep.subr.mxu0 0.0
        %762 = vmatpush1.xpose.msra.mxu0 0.0
        %763 = vmatprep.subr.mxu0 0.0
        %764 = vmatpush1.xpose.msra.mxu0 0.0
        %765 = vmatprep.subr.mxu0 0.0
        %766 = vmatpush1.xpose.msra.mxu0 0.0
        %767 = vmatprep.subr.mxu0 0.0
        %768 = vmatpush1.xpose.msra.mxu0 0.0
        %769 = vmatprep.subr.mxu0 0.0
        %770 = vmatpush1.xpose.msra.mxu0 0.0
        %771 = vmatprep.subr.mxu0 0.0
        %772 = vmatpush1.xpose.msra.mxu0 0.0
        %773 = vmatprep.mubr.f32.mxu0 0.0
        %774 = vmatmul.mubr.f32.gmra.mrb[0].mxu0 %v705
        %v775 = vpop.f32.mrb[0].mxu0
        %v776 = vadd.f32 0.0, %v775
        %v777 = vpop.f32.mrb[0].mxu0
        %778 = vdwg.mxu0
        %v779 = vsel %vm361, %v776, -inf
        %780 = vmax.xlane.f32.xlu0 %v779
        %v781 = vpop.xlane.xlu0 %780
        %v782 = vsub.f32 %v776, %v781
        %v783 = vmul.f32 %v782, 1.442695
        %v784 = vpow.pop %v783
        %v785 = vsel %vm361, %v784, 0.0
        %786 = vadd.xlane.f32.xlu0 %v785
        %v787 = vpop.xlane.xlu0 %786
        %788 = vrot.lane.b32.xlu0 %v699, 48
        %v789 = vpop.permute.xlu0 %788
        %v792 = vsel %vm361, %v784, 0
        %794 = vmatprep.subr.mxu0 0.0
        %795 = vmatpush1.msra.mxu0 %v789
        %796 = vmatprep.subr.mxu0 0.0
        %797 = vmatpush1.msra.mxu0 0.0
        %798 = vmatprep.subr.mxu0 0.0
        %799 = vmatpush1.msra.mxu0 0.0
        %800 = vmatprep.subr.mxu0 0.0
        %801 = vmatpush1.msra.mxu0 0.0
        %802 = vmatprep.subr.mxu0 0.0
        %803 = vmatpush1.msra.mxu0 0.0
        %804 = vmatprep.subr.mxu0 0.0
        %805 = vmatpush1.msra.mxu0 0.0
        %806 = vmatprep.subr.mxu0 0.0
        %807 = vmatpush1.msra.mxu0 0.0
        %808 = vmatprep.subr.mxu0 0.0
        %809 = vmatpush1.msra.mxu0 0.0
        %810 = vmatprep.subr.mxu0 0.0
        %811 = vmatpush1.msra.mxu0 0.0
        %812 = vmatprep.subr.mxu0 0.0
        %813 = vmatpush1.msra.mxu0 0.0
        %814 = vmatprep.subr.mxu0 0.0
        %815 = vmatpush1.msra.mxu0 0.0
        %816 = vmatprep.subr.mxu0 0.0
        %817 = vmatpush1.msra.mxu0 0.0
        %818 = vmatprep.subr.mxu0 0.0
        %819 = vmatpush1.msra.mxu0 0.0
        %820 = vmatprep.subr.mxu0 0.0
        %821 = vmatpush1.msra.mxu0 0.0
        %822 = vmatprep.subr.mxu0 0.0
        %823 = vmatpush1.msra.mxu0 0.0
        %824 = vmatprep.subr.mxu0 0.0
        %825 = vmatpush1.msra.mxu0 0.0
        %826 = vmatprep.subr.mxu0 0.0
        %827 = vmatpush1.msra.mxu0 0.0
        %828 = vmatprep.subr.mxu0 0.0
        %829 = vmatpush1.msra.mxu0 0.0
        %830 = vmatprep.subr.mxu0 0.0
        %831 = vmatpush1.msra.mxu0 0.0
        %832 = vmatprep.subr.mxu0 0.0
        %833 = vmatpush1.msra.mxu0 0.0
        %834 = vmatprep.subr.mxu0 0.0
        %835 = vmatpush1.msra.mxu0 0.0
        %836 = vmatprep.subr.mxu0 0.0
        %837 = vmatpush1.msra.mxu0 0.0
        %838 = vmatprep.subr.mxu0 0.0
        %839 = vmatpush1.msra.mxu0 0.0
        %840 = vmatprep.subr.mxu0 0.0
        %841 = vmatpush1.msra.mxu0 0.0
        %842 = vmatprep.subr.mxu0 0.0
        %843 = vmatpush1.msra.mxu0 0.0
        %844 = vmatprep.subr.mxu0 0.0
        %845 = vmatpush1.msra.mxu0 0.0
        %846 = vmatprep.subr.mxu0 0.0
        %847 = vmatpush1.msra.mxu0 0.0
        %848 = vmatprep.subr.mxu0 0.0
        %849 = vmatpush1.msra.mxu0 0.0
        %850 = vmatprep.subr.mxu0 0.0
        %851 = vmatpush1.msra.mxu0 0.0
        %852 = vmatprep.subr.mxu0 0.0
        %853 = vmatpush1.msra.mxu0 0.0
        %854 = vmatprep.subr.mxu0 0.0
        %855 = vmatpush1.msra.mxu0 0.0
        %856 = vmatprep.subr.mxu0 0.0
        %857 = vmatpush1.msra.mxu0 0.0
        %858 = vmatprep.mubr.f32.mxu0 0.0
        %859 = vmatmul.mubr.f32.gmra.mrb[0].mxu0 %v792
        %v860 = vpop.f32.mrb[0].mxu0
        %v861 = vadd.f32 0.0, %v860
        %v862 = vpop.f32.mrb[0].mxu0
        %863 = vdwg.mxu0
        %v864 = vrcp.pop %v787
        %v865 = vmul.f32 %v864, 0.17677669
        %v866 = vmul.f32 %v861, %v865
        %868 = vrot.lane.b32.xlu0 %v866, 16
        %v869 = vpop.permute.xlu0 %868
        %vm871 = vcmask 195712
        %872 = vst.msk [vmem:[#allocation3] sm:$0xff] %vm871, %v869
        %v873 = vld [vmem:[#allocation2] sm:$0xff]
        %875 = vrot.lane.b32.xlu0 %v873, 104
        %v876 = vpop.permute.xlu0 %875
        %877 = vrot.lane.b32.xlu0 %v873, 72
        %v878 = vpop.permute.xlu0 %877
        %v879 = vsel %vm361, %v876, 0
        %v881 = vsel %vm361, %v878, 0
        %883 = vmatprep.subr.mxu0 0.0
        %884 = vmatpush1.xpose.msra.mxu0 %v881
        %885 = vmatprep.subr.mxu0 0.0
        %886 = vmatpush1.xpose.msra.mxu0 0.0
        %887 = vmatprep.subr.mxu0 0.0
        %888 = vmatpush1.xpose.msra.mxu0 0.0
        %889 = vmatprep.subr.mxu0 0.0
        %890 = vmatpush1.xpose.msra.mxu0 0.0
        %891 = vmatprep.subr.mxu0 0.0
        %892 = vmatpush1.xpose.msra.mxu0 0.0
        %893 = vmatprep.subr.mxu0 0.0
        %894 = vmatpush1.xpose.msra.mxu0 0.0
        %895 = vmatprep.subr.mxu0 0.0
        %896 = vmatpush1.xpose.msra.mxu0 0.0
        %897 = vmatprep.subr.mxu0 0.0
        %898 = vmatpush1.xpose.msra.mxu0 0.0
        %899 = vmatprep.subr.mxu0 0.0
        %900 = vmatpush1.xpose.msra.mxu0 0.0
        %901 = vmatprep.subr.mxu0 0.0
        %902 = vmatpush1.xpose.msra.mxu0 0.0
        %903 = vmatprep.subr.mxu0 0.0
        %904 = vmatpush1.xpose.msra.mxu0 0.0
        %905 = vmatprep.subr.mxu0 0.0
        %906 = vmatpush1.xpose.msra.mxu0 0.0
        %907 = vmatprep.subr.mxu0 0.0
        %908 = vmatpush1.xpose.msra.mxu0 0.0
        %909 = vmatprep.subr.mxu0 0.0
        %910 = vmatpush1.xpose.msra.mxu0 0.0
        %911 = vmatprep.subr.mxu0 0.0
        %912 = vmatpush1.xpose.msra.mxu0 0.0
        %913 = vmatprep.subr.mxu0 0.0
        %914 = vmatpush1.xpose.msra.mxu0 0.0
        %915 = vmatprep.subr.mxu0 0.0
        %916 = vmatpush1.xpose.msra.mxu0 0.0
        %917 = vmatprep.subr.mxu0 0.0
        %918 = vmatpush1.xpose.msra.mxu0 0.0
        %919 = vmatprep.subr.mxu0 0.0
        %920 = vmatpush1.xpose.msra.mxu0 0.0
        %921 = vmatprep.subr.mxu0 0.0
        %922 = vmatpush1.xpose.msra.mxu0 0.0
        %923 = vmatprep.subr.mxu0 0.0
        %924 = vmatpush1.xpose.msra.mxu0 0.0
        %925 = vmatprep.subr.mxu0 0.0
        %926 = vmatpush1.xpose.msra.mxu0 0.0
        %927 = vmatprep.subr.mxu0 0.0
        %928 = vmatpush1.xpose.msra.mxu0 0.0
        %929 = vmatprep.subr.mxu0 0.0
        %930 = vmatpush1.xpose.msra.mxu0 0.0
        %931 = vmatprep.subr.mxu0 0.0
        %932 = vmatpush1.xpose.msra.mxu0 0.0
        %933 = vmatprep.subr.mxu0 0.0
        %934 = vmatpush1.xpose.msra.mxu0 0.0
        %935 = vmatprep.subr.mxu0 0.0
        %936 = vmatpush1.xpose.msra.mxu0 0.0
        %937 = vmatprep.subr.mxu0 0.0
        %938 = vmatpush1.xpose.msra.mxu0 0.0
        %939 = vmatprep.subr.mxu0 0.0
        %940 = vmatpush1.xpose.msra.mxu0 0.0
        %941 = vmatprep.subr.mxu0 0.0
        %942 = vmatpush1.xpose.msra.mxu0 0.0
        %943 = vmatprep.subr.mxu0 0.0
        %944 = vmatpush1.xpose.msra.mxu0 0.0
        %945 = vmatprep.subr.mxu0 0.0
        %946 = vmatpush1.xpose.msra.mxu0 0.0
        %947 = vmatprep.mubr.f32.mxu0 0.0
        %948 = vmatmul.mubr.f32.gmra.mrb[0].mxu0 %v879
        %v949 = vpop.f32.mrb[0].mxu0
        %v950 = vadd.f32 0.0, %v949
        %v951 = vpop.f32.mrb[0].mxu0
        %952 = vdwg.mxu0
        %v953 = vsel %vm361, %v950, -inf
        %954 = vmax.xlane.f32.xlu0 %v953
        %v955 = vpop.xlane.xlu0 %954
        %v956 = vsub.f32 %v950, %v955
        %v957 = vmul.f32 %v956, 1.442695
        %v958 = vpow.pop %v957
        %v959 = vsel %vm361, %v958, 0.0
        %960 = vadd.xlane.f32.xlu0 %v959
        %v961 = vpop.xlane.xlu0 %960
        %962 = vrot.lane.b32.xlu0 %v873, 40
        %v963 = vpop.permute.xlu0 %962
        %v966 = vsel %vm361, %v958, 0
        %968 = vmatprep.subr.mxu0 0.0
        %969 = vmatpush1.msra.mxu0 %v963
        %970 = vmatprep.subr.mxu0 0.0
        %971 = vmatpush1.msra.mxu0 0.0
        %972 = vmatprep.subr.mxu0 0.0
        %973 = vmatpush1.msra.mxu0 0.0
        %974 = vmatprep.subr.mxu0 0.0
        %975 = vmatpush1.msra.mxu0 0.0
        %976 = vmatprep.subr.mxu0 0.0
        %977 = vmatpush1.msra.mxu0 0.0
        %978 = vmatprep.subr.mxu0 0.0
        %979 = vmatpush1.msra.mxu0 0.0
        %980 = vmatprep.subr.mxu0 0.0
        %981 = vmatpush1.msra.mxu0 0.0
        %982 = vmatprep.subr.mxu0 0.0
        %983 = vmatpush1.msra.mxu0 0.0
        %984 = vmatprep.subr.mxu0 0.0
        %985 = vmatpush1.msra.mxu0 0.0
        %986 = vmatprep.subr.mxu0 0.0
        %987 = vmatpush1.msra.mxu0 0.0
        %988 = vmatprep.subr.mxu0 0.0
        %989 = vmatpush1.msra.mxu0 0.0
        %990 = vmatprep.subr.mxu0 0.0
        %991 = vmatpush1.msra.mxu0 0.0
        %992 = vmatprep.subr.mxu0 0.0
        %993 = vmatpush1.msra.mxu0 0.0
        %994 = vmatprep.subr.mxu0 0.0
        %995 = vmatpush1.msra.mxu0 0.0
        %996 = vmatprep.subr.mxu0 0.0
        %997 = vmatpush1.msra.mxu0 0.0
        %998 = vmatprep.subr.mxu0 0.0
        %999 = vmatpush1.msra.mxu0 0.0
        %1000 = vmatprep.subr.mxu0 0.0
        %1001 = vmatpush1.msra.mxu0 0.0
        %1002 = vmatprep.subr.mxu0 0.0
        %1003 = vmatpush1.msra.mxu0 0.0
        %1004 = vmatprep.subr.mxu0 0.0
        %1005 = vmatpush1.msra.mxu0 0.0
        %1006 = vmatprep.subr.mxu0 0.0
        %1007 = vmatpush1.msra.mxu0 0.0
        %1008 = vmatprep.subr.mxu0 0.0
        %1009 = vmatpush1.msra.mxu0 0.0
        %1010 = vmatprep.subr.mxu0 0.0
        %1011 = vmatpush1.msra.mxu0 0.0
        %1012 = vmatprep.subr.mxu0 0.0
        %1013 = vmatpush1.msra.mxu0 0.0
        %1014 = vmatprep.subr.mxu0 0.0
        %1015 = vmatpush1.msra.mxu0 0.0
        %1016 = vmatprep.subr.mxu0 0.0
        %1017 = vmatpush1.msra.mxu0 0.0
        %1018 = vmatprep.subr.mxu0 0.0
        %1019 = vmatpush1.msra.mxu0 0.0
        %1020 = vmatprep.subr.mxu0 0.0
        %1021 = vmatpush1.msra.mxu0 0.0
        %1022 = vmatprep.subr.mxu0 0.0
        %1023 = vmatpush1.msra.mxu0 0.0
        %1024 = vmatprep.subr.mxu0 0.0
        %1025 = vmatpush1.msra.mxu0 0.0
        %1026 = vmatprep.subr.mxu0 0.0
        %1027 = vmatpush1.msra.mxu0 0.0
        %1028 = vmatprep.subr.mxu0 0.0
        %1029 = vmatpush1.msra.mxu0 0.0
        %1030 = vmatprep.subr.mxu0 0.0
        %1031 = vmatpush1.msra.mxu0 0.0
        %1032 = vmatprep.mubr.f32.mxu0 0.0
        %1033 = vmatmul.mubr.f32.gmra.mrb[0].mxu0 %v966
        %v1034 = vpop.f32.mrb[0].mxu0
        %v1035 = vadd.f32 0.0, %v1034
        %v1036 = vpop.f32.mrb[0].mxu0
        %1037 = vdwg.mxu0
        %v1038 = vrcp.pop %v961
        %v1039 = vmul.f32 %v1038, 0.17677669
        %v1040 = vmul.f32 %v1035, %v1039
        %1042 = vrot.lane.b32.xlu0 %v1040, 24
        %v1043 = vpop.permute.xlu0 %1042
        %vm1045 = vcmask 261312
        %1046 = vst.msk [vmem:[#allocation3] sm:$0xff] %vm1045, %v1043
        %v1047 = vld [vmem:[#allocation3] sm:$0xff]
        %v1048 = vld [vmem:[#allocation9] sm:$0xff]
        %v1049 = vld [vmem:[#allocation9 + $0x8] sm:$0xff]
        %v1050 = vld [vmem:[#allocation9 + $0x10] sm:$0xff]
        %v1051 = vld [vmem:[#allocation9 + $0x18] sm:$0xff]
        %v1052 = vld [vmem:[%s4] sm:$0x1]
        %v1054 = vlaneseq
        %v1055 = vshrl.u32 %v1054, 7
        %v1056 = vsub.s32 0, %v1055
        %v1057 = vrot.slane %v1052, %v1056
        %v1060 = vsel %vm281, %v1047, 0
        %1062 = vmatprep.subr.mxu0 0.0
        %1063 = vmatpush1.msra.mxu0 %v1048
        %1064 = vmatprep.subr.mxu0 0.0
        %1065 = vmatpush1.msra.mxu0 %v1049
        %1066 = vmatprep.subr.mxu0 0.0
        %1067 = vmatpush1.msra.mxu0 %v1050
        %1068 = vmatprep.subr.mxu0 0.0
        %1069 = vmatpush1.msra.mxu0 %v1051
        %1070 = vmatprep.subr.mxu0 0.0
        %1071 = vmatpush1.msra.mxu0 0.0
        %1072 = vmatprep.subr.mxu0 0.0
        %1073 = vmatpush1.msra.mxu0 0.0
        %1074 = vmatprep.subr.mxu0 0.0
        %1075 = vmatpush1.msra.mxu0 0.0
        %1076 = vmatprep.subr.mxu0 0.0
        %1077 = vmatpush1.msra.mxu0 0.0
        %1078 = vmatprep.subr.mxu0 0.0
        %1079 = vmatpush1.msra.mxu0 0.0
        %1080 = vmatprep.subr.mxu0 0.0
        %1081 = vmatpush1.msra.mxu0 0.0
        %1082 = vmatprep.subr.mxu0 0.0
        %1083 = vmatpush1.msra.mxu0 0.0
        %1084 = vmatprep.subr.mxu0 0.0
        %1085 = vmatpush1.msra.mxu0 0.0
        %1086 = vmatprep.subr.mxu0 0.0
        %1087 = vmatpush1.msra.mxu0 0.0
        %1088 = vmatprep.subr.mxu0 0.0
        %1089 = vmatpush1.msra.mxu0 0.0
        %1090 = vmatprep.subr.mxu0 0.0
        %1091 = vmatpush1.msra.mxu0 0.0
        %1092 = vmatprep.subr.mxu0 0.0
        %1093 = vmatpush1.msra.mxu0 0.0
        %1094 = vmatprep.subr.mxu0 0.0
        %1095 = vmatpush1.msra.mxu0 0.0
        %1096 = vmatprep.subr.mxu0 0.0
        %1097 = vmatpush1.msra.mxu0 0.0
        %1098 = vmatprep.subr.mxu0 0.0
        %1099 = vmatpush1.msra.mxu0 0.0
        %1100 = vmatprep.subr.mxu0 0.0
        %1101 = vmatpush1.msra.mxu0 0.0
        %1102 = vmatprep.subr.mxu0 0.0
        %1103 = vmatpush1.msra.mxu0 0.0
        %1104 = vmatprep.subr.mxu0 0.0
        %1105 = vmatpush1.msra.mxu0 0.0
        %1106 = vmatprep.subr.mxu0 0.0
        %1107 = vmatpush1.msra.mxu0 0.0
        %1108 = vmatprep.subr.mxu0 0.0
        %1109 = vmatpush1.msra.mxu0 0.0
        %1110 = vmatprep.subr.mxu0 0.0
        %1111 = vmatpush1.msra.mxu0 0.0
        %1112 = vmatprep.subr.mxu0 0.0
        %1113 = vmatpush1.msra.mxu0 0.0
        %1114 = vmatprep.subr.mxu0 0.0
        %1115 = vmatpush1.msra.mxu0 0.0
        %1116 = vmatprep.subr.mxu0 0.0
        %1117 = vmatpush1.msra.mxu0 0.0
        %1118 = vmatprep.subr.mxu0 0.0
        %1119 = vmatpush1.msra.mxu0 0.0
        %1120 = vmatprep.subr.mxu0 0.0
        %1121 = vmatpush1.msra.mxu0 0.0
        %1122 = vmatprep.subr.mxu0 0.0
        %1123 = vmatpush1.msra.mxu0 0.0
        %1124 = vmatprep.subr.mxu0 0.0
        %1125 = vmatpush1.msra.mxu0 0.0
        %1126 = vmatprep.mubr.f32.mxu0 0.0
        %1127 = vmatmul.mubr.f32.gmra.mrb[0].mxu0 %v1060
        %v1128 = vpop.f32.mrb[0].mxu0
        %v1129 = vadd.f32 %v1057, %v1128
        %v1130 = vpop.f32.mrb[0].mxu0
        %1131 = vdwg.mxu0
        %1132 = vst.msk [vmem:[%s268] sm:$0xff] %vm281, %v1129
        %s1133 = sand.u32 %s141, 1
        %s1134 = scalar_lea.sflag [#allocation6], %s1133
        %s1135 = sand.u32 %s141, 1
        %s1136 = smul.addr %s1135, 8
        %s1137 = scalar_lea.vmem [#allocation10], %s1136
        // Predicated region
        $region53: #{tpu_custom_call.1} parent=39 // pred_check
          %p1138 = pneg %p151
        $region54: #{tpu_custom_call.1} parent=39 // pred_check_branch
          %1140 = sbr.rel (%p1138) target = $region56
        $region55: #{tpu_custom_call.1} parent=39 // pred_region
          %s1142 = ssub.s32 128, 128
          %1143 = vsyncadd %s1134, %s1142
          %s1144 = smul.addr %s23, 128
          %s1145 = scalar_lea.hbm %s5, %s1144
          %s1147 = sshll.u32 %s1137, 4
          %s1148 = int_to_ptr.vmem [resolvable:$true] %s1147
          %1150 = dma.vmem_to_hbm [thread:$0]  %s1148, 128, %s1145, %s1134
        $region56: #{tpu_custom_call.1} parent=39 // pred_fallthru
          _
      $region40: #{tpu_custom_call.1} parent=5 // pred_fallthru
        _
      %p1151 = scmp.le.s32.totalorder 2, %s18
      // Predicated region
      $region57: #{tpu_custom_call.1} parent=5 // pred_check
        %p1152 = pneg %p1151
      $region58: #{tpu_custom_call.1} parent=5 // pred_check_branch
        %1154 = sbr.rel (%p1152) target = $region60
      $region59: #{tpu_custom_call.1} parent=5 // pred_region
        %s1155 = ssub.s32 %s18, 2
        // Predicated region
        $region61: #{tpu_custom_call.1} parent=59 // pred_check
          %p1156 = pneg %p157
        $region62: #{tpu_custom_call.1} parent=59 // pred_check_branch
          %1158 = sbr.rel (%p1156) target = $region64
        $region63: #{tpu_custom_call.1} parent=59 // pred_region
          %s1159 = sand.u32 %s142, 1
          %s1160 = scalar_lea.sflag [#allocation6], %s1159
          %s1161 = sand.u32 %s142, 1
          %s1162 = smul.addr %s1161, 8
          %s1163 = scalar_lea.vmem [#allocation10], %s1162
          %1164 = dma.done %s1160, 128
        $region64: #{tpu_custom_call.1} parent=59 // pred_fallthru
          _
      $region60: #{tpu_custom_call.1} parent=5 // pred_fallthru
        _
    $region6: #{tpu_custom_call.1} parent=1 // loop_footer
      %s22 = sadd.s32 1, %s18
    $region7: #{tpu_custom_call.1} parent=1 // loop_footer_branch
      %17 = sbr.rel target = $region3
    $region8: #{tpu_custom_call.1} parent=1 // loop_exit
      _
    %1165 = vsyncpa [#allocation5], 1
    %s1166 = scalar_lea.sflag [#allocation5], 1
    %1167 = vsyncpa %s1166, 1
    %1168 = vsyncpa [#allocation8], 1
    %1169 = vsyncpa [#allocation6], 1
    %s1170 = scalar_lea.sflag [#allocation6], 1
    %1171 = vsyncpa %s1170, 1

</llo_original>
